<compile_context>
chip_gen: v7x
topology: tpu7x:2x2x1
jax: 0.10.0
libtpu: 0.0.40
codegen_flags: <defaults>
</compile_context>

<pallas_src>
import functools

import jax
import jax.numpy as jnp
from jax.experimental import pallas as pl
from jax.experimental.pallas import tpu as pltpu


def _make_encoder_kernel(T, Bp, D, H, depth):
    """Fused bi-LSTM encoder kernel (all layers + head in one invocation)."""
    f32 = jnp.float32
    G = 4 * H      # per-direction gate width
    G2 = 8 * H     # fused fwd|bwd gate width

    def kernel(*refs):
        # ---- unpack refs ---------------------------------------------------
        idx = 0
        x_ref = refs[idx]; idx += 1                     # (T*Bp, D) bf16
        layer_refs = []
        for layer in range(depth):
            n = 3 if layer == 0 else 4
            layer_refs.append(refs[idx:idx + n]); idx += n
        wfc_ref = refs[idx]; idx += 1                   # (H, H) f32
        join_ref = refs[idx]; idx += 1                  # (T*Bp, H) out
        s_ref = refs[idx]; idx += 1                     # (Bp, H) out
        outf_scr = refs[idx]; idx += 1                  # (T*Bp, H) f32
        outb_scr = refs[idx]; idx += 1                  # (T*Bp, H) f32
        gx_scr = refs[idx]; idx += 1                    # (T*Bp, 8H) f32

        h_last = None
        for layer in range(depth):
            # ---- input projection for ALL timesteps, both directions fused --
            if layer == 0:
                wih_ref, whh_ref, b_ref = layer_refs[layer]
                gx = jnp.dot(x_ref[...], wih_ref[...],
                             preferred_element_type=f32)           # (T*Bp, 8H)
            else:
                wtop_ref, wbot_ref, whh_ref, b_ref = layer_refs[layer]
                of = outf_scr[...].astype(jnp.bfloat16)
                ob = outb_scr[...].astype(jnp.bfloat16)
                gx = (jnp.dot(of, wtop_ref[...], preferred_element_type=f32)
                      + jnp.dot(ob, wbot_ref[...], preferred_element_type=f32))
            gx_scr[...] = gx + b_ref[...]

            whh = whh_ref[...]                                      # (H, 8H) f32

            # ---- serial recurrence: both directions per step, fori_loop -----
            def step(t, carry):
                h, c = carry                      # (2Bp, H) each; [:Bp]=fwd, [Bp:]=bwd
                tb = T - 1 - t
                row_f = pl.multiple_of(t * Bp, Bp)
                row_b = pl.multiple_of(tb * Bp, Bp)
                hh = jnp.dot(h, whh, preferred_element_type=f32)    # (2Bp, 8H)
                gates_f = gx_scr[pl.ds(row_f, Bp), pl.ds(0, G)] + hh[:Bp, :G]
                gates_b = gx_scr[pl.ds(row_b, Bp), pl.ds(G, G)] + hh[Bp:, G:]
                gates = jnp.concatenate([gates_f, gates_b], axis=0)  # (2Bp, 4H)
                # gate order [i, f, o, g]: one sigmoid slab + one tanh
                sig = jax.nn.sigmoid(gates[:, :3 * H])
                gi = sig[:, 0 * H:1 * H]
                gf = sig[:, 1 * H:2 * H]
                go = sig[:, 2 * H:3 * H]
                gg = jnp.tanh(gates[:, 3 * H:])
                c_new = gf * c + gi * gg
                h_new = go * jnp.tanh(c_new)
                outf_scr[pl.ds(row_f, Bp), :] = h_new[:Bp, :]
                outb_scr[pl.ds(row_b, Bp), :] = h_new[Bp:, :]
                return h_new, c_new

            h0 = jnp.zeros((2 * Bp, H), f32)
            c0 = jnp.zeros((2 * Bp, H), f32)
            h_last, _ = jax.lax.fori_loop(0, T, step, (h0, c0))

        # ---- head: join = out_f + out_b ; s = tanh((h_bwd + h_fwd) @ Wfc^T) ----
        join_ref[...] = outf_scr[...] + outb_scr[...]
        s_ref[...] = jnp.tanh(
            jnp.dot(h_last[:Bp, :] + h_last[Bp:, :], wfc_ref[...],
                    preferred_element_type=f32))

    return kernel


# ----------------------------------------------------------------------------
# One-time weight packing (transpose, gate reorder i,f,g,o -> i,f,o,g, fwd|bwd
# concat, bias fusion, bf16 cast for the MXU-bound hoisted projection).
# ----------------------------------------------------------------------------
def pack_params(params, w_fc, hidden_dim, depth):
    H = hidden_dim
    perm = jnp.concatenate([jnp.arange(0, H), jnp.arange(H, 2 * H),
                            jnp.arange(3 * H, 4 * H), jnp.arange(2 * H, 3 * H)])
    packed = []
    for layer in range(depth):
        p = params[layer]
        wihs, whhs, bs = [], [], []
        for d in ("f", "b"):
            wihs.append(jnp.transpose(p[f"w_ih_{d}"][perm]))          # (din, 4H)
            whhs.append(jnp.transpose(p[f"w_hh_{d}"][perm]))          # (H, 4H)
            bs.append((p[f"b_ih_{d}"] + p[f"b_hh_{d}"])[perm])        # (4H,)
        wih_cat = jnp.concatenate(wihs, axis=1).astype(jnp.bfloat16)  # (din, 8H)
        whh_cat = jnp.concatenate(whhs, axis=1).astype(jnp.float32)   # (H, 8H)
        b_cat = jnp.concatenate(bs).reshape(1, 8 * H).astype(jnp.float32)
        if layer == 0:
            packed += [wih_cat, whh_cat, b_cat]
        else:
            # split into fwd-feature / bwd-feature halves to avoid the
            # activation concat inside the kernel.
            packed += [wih_cat[:H, :], wih_cat[H:, :], whh_cat, b_cat]
    packed.append(jnp.transpose(w_fc).astype(jnp.float32))            # (H, H)
    return packed


def encoder_forward(x, lengths, packed, hidden_dim, depth):
    """Full Encoder.forward (bidirectional=True path), single fused Pallas kernel.

    x: (T, B, D) as consumed by nn.LSTM.  Returns (join (T,B,H), s (B,H)).
    """
    del lengths  # unused by the PyTorch forward as well
    T, B, D = x.shape
    H = hidden_dim
    Bp = ((B + 7) // 8) * 8                 # sublane-aligned batch

    xp = x if Bp == B else jnp.pad(x, ((0, 0), (0, Bp - B), (0, 0)))
    x2 = xp.reshape(T * Bp, D).astype(jnp.bfloat16)

    # VMEM budget (scratch + ~double-buffered I/O + weights) with headroom.
    n = T * Bp
    scratch_bytes = 2 * n * H * 4 + n * 8 * H * 4
    io_bytes = n * D * 2 + n * H * 4 + Bp * H * 4
    w_bytes = sum(int(a.size) * a.dtype.itemsize for a in packed)
    vmem_limit = int(min(max(scratch_bytes + 2 * (io_bytes + w_bytes) + (4 << 20),
                             16 << 20), 120 << 20))

    kernel = _make_encoder_kernel(T, Bp, D, H, depth)
    join2, s = pl.pallas_call(
        kernel,
        out_shape=(
            jax.ShapeDtypeStruct((T * Bp, H), jnp.float32),
            jax.ShapeDtypeStruct((Bp, H), jnp.float32),
        ),
        scratch_shapes=[
            pltpu.VMEM((T * Bp, H), jnp.float32),       # forward hidden seq
            pltpu.VMEM((T * Bp, H), jnp.float32),       # backward hidden seq
            pltpu.VMEM((T * Bp, 8 * H), jnp.float32),   # fused fwd|bwd x-projection
        ],
        compiler_params=pltpu.CompilerParams(vmem_limit_bytes=vmem_limit),
    )(x2, *packed)

    join = join2.reshape(T, Bp, H)[:, :B, :]
    return join, s[:B]


# ----------------------------------------------------------------------------
# Parameter init (PyTorch default: uniform(-1/sqrt(H), 1/sqrt(H)))
# ----------------------------------------------------------------------------
def init_params(key, input_dim, hidden_dim, depth):
    bound = 1.0 / float(jnp.sqrt(jnp.float32(hidden_dim)))
    params = []
    for layer in range(depth):
        din = input_dim if layer == 0 else 2 * hidden_dim
        layer_p = {}
        for direction in ("f", "b"):
            key, k1, k2, k3, k4 = jax.random.split(key, 5)
            layer_p[f"w_ih_{direction}"] = jax.random.uniform(
                k1, (4 * hidden_dim, din), jnp.float32, -bound, bound)
            layer_p[f"w_hh_{direction}"] = jax.random.uniform(
                k2, (4 * hidden_dim, hidden_dim), jnp.float32, -bound, bound)
            layer_p[f"b_ih_{direction}"] = jax.random.uniform(
                k3, (4 * hidden_dim,), jnp.float32, -bound, bound)
            layer_p[f"b_hh_{direction}"] = jax.random.uniform(
                k4, (4 * hidden_dim,), jnp.float32, -bound, bound)
        params.append(layer_p)
    key, kfc = jax.random.split(key)
    w_fc = jax.random.uniform(kfc, (hidden_dim, hidden_dim), jnp.float32,
                              -bound, bound)
    return params, w_fc


# ----------------------------------------------------------------------------
# Pure-JAX reference (lax.scan LSTM, f32, PyTorch gate order) for correctness.
# ----------------------------------------------------------------------------
def _ref_lstm_dir(x, w_ih, w_hh, b_ih, b_hh):
    T, B, _ = x.shape
    H = w_hh.shape[1]

    def step(carry, x_t):
        h, c = carry
        gates = x_t @ w_ih.T + h @ w_hh.T + b_ih + b_hh
        i = jax.nn.sigmoid(gates[:, :H])
        f = jax.nn.sigmoid(gates[:, H:2 * H])
        g = jnp.tanh(gates[:, 2 * H:3 * H])
        o = jax.nn.sigmoid(gates[:, 3 * H:])
        c = f * c + i * g
        h = o * jnp.tanh(c)
        return (h, c), h

    (hT, _), hs = jax.lax.scan(
        step, (jnp.zeros((B, H), jnp.float32), jnp.zeros((B, H), jnp.float32)), x)
    return hs, hT


def _ref_encoder(x, params, w_fc, hidden_dim, depth):
    inp = x
    for layer in range(depth):
        p = params[layer]
        hs_f, hT_f = _ref_lstm_dir(inp, p["w_ih_f"], p["w_hh_f"],
                                   p["b_ih_f"], p["b_hh_f"])
        hs_b_rev, hT_b = _ref_lstm_dir(inp[::-1], p["w_ih_b"], p["w_hh_b"],
                                       p["b_ih_b"], p["b_hh_b"])
        hs_b = hs_b_rev[::-1]
        inp = jnp.concatenate([hs_f, hs_b], axis=-1)
    join = hs_f + hs_b
    s = jnp.tanh((hT_b + hT_f) @ w_fc.T)
    return join, s


if __name__ == "__main__":
    T, B, D, H, DEPTH = 8, 4, 16, 32, 2
    key = jax.random.PRNGKey(0)
    key, kx = jax.random.split(key)
    x = jax.random.normal(kx, (T, B, D), dtype=jnp.float32)
    lengths = jnp.full((B,), T, dtype=jnp.int32)

    params, w_fc = init_params(jax.random.PRNGKey(0), D, H, DEPTH)
    packed = pack_params(params, w_fc, H, DEPTH)   # one-time packing

    fwd = jax.jit(functools.partial(encoder_forward, hidden_dim=H, depth=DEPTH))
    join, s = fwd(x, lengths, packed)
    jax.block_until_ready((join, s))

    join_ref, s_ref = _ref_encoder(x, params, w_fc, H, DEPTH)
    assert join.shape == (T, B, H) and s.shape == (B, H)
    # bf16 inputs to the hoisted x-projection (f32 accumulate) -> ~1e-2 tolerance
    assert jnp.allclose(join, join_ref, rtol=2e-2, atol=2e-2), "join mismatch"
    assert jnp.allclose(s, s_ref, rtol=2e-2, atol=2e-2), "s mismatch"

    print("KERNEL_OK")
</pallas_src>

<mosaic_0001>
module attributes {stable_mosaic.version = 11 : i64} {
  func.func @kernel(%arg0: memref<64x16xbf16, #tpu.memory_space<vmem>>, %arg1: memref<16x256xbf16, #tpu.memory_space<vmem>>, %arg2: memref<32x256xf32, #tpu.memory_space<vmem>>, %arg3: memref<1x256xf32, #tpu.memory_space<vmem>>, %arg4: memref<32x256xbf16, #tpu.memory_space<vmem>>, %arg5: memref<32x256xbf16, #tpu.memory_space<vmem>>, %arg6: memref<32x256xf32, #tpu.memory_space<vmem>>, %arg7: memref<1x256xf32, #tpu.memory_space<vmem>>, %arg8: memref<32x32xf32, #tpu.memory_space<vmem>>, %arg9: memref<64x32xf32, #tpu.memory_space<vmem>>, %arg10: memref<8x32xf32, #tpu.memory_space<vmem>>, %arg11: memref<64x32xf32, #tpu.memory_space<vmem>>, %arg12: memref<64x32xf32, #tpu.memory_space<vmem>>, %arg13: memref<64x256xf32, #tpu.memory_space<vmem>>) attributes {dimension_semantics = [], scalar_prefetch = 0 : i64, scratch_operands = 3 : i64, tpu.core_type = #tpu.core_type<tc>} {
    %c0 = arith.constant 0 : index
    %c0_0 = arith.constant 0 : index
    %0 = vector.load %arg0[%c0, %c0_0] : memref<64x16xbf16, #tpu.memory_space<vmem>>, vector<64x16xbf16>
    %c0_1 = arith.constant 0 : index
    %c0_2 = arith.constant 0 : index
    %1 = vector.load %arg1[%c0_1, %c0_2] : memref<16x256xbf16, #tpu.memory_space<vmem>>, vector<16x256xbf16>
    %cst = arith.constant dense<0.000000e+00> : vector<64x256xf32>
    %2 = tpu.matmul %0, %1, %cst {dimension_numbers = #tpu.dot_dimension_numbers<[1], [0], [0], [1], [0, 0, 1, 1], [], []>} : vector<64x16xbf16>, vector<16x256xbf16>, vector<64x256xf32> -> vector<64x256xf32>
    %c0_3 = arith.constant 0 : index
    %c0_4 = arith.constant 0 : index
    %3 = vector.load %arg3[%c0_3, %c0_4] : memref<1x256xf32, #tpu.memory_space<vmem>>, vector<1x256xf32>
    %4 = vector.broadcast %3 : vector<1x256xf32> to vector<64x256xf32>
    %5 = arith.addf %2, %4 : vector<64x256xf32>
    %c0_5 = arith.constant 0 : index
    %c0_6 = arith.constant 0 : index
    %6 = vector.load %arg13[%c0_5, %c0_6] : memref<64x256xf32, #tpu.memory_space<vmem>>, vector<64x256xf32>
    tpu.vector_store %arg13[%c0_5, %c0_6], %5 {strides = array<i32>} : memref<64x256xf32, #tpu.memory_space<vmem>>, vector<64x256xf32>,
    %c0_7 = arith.constant 0 : index
    %c0_8 = arith.constant 0 : index
    %7 = vector.load %arg2[%c0_7, %c0_8] : memref<32x256xf32, #tpu.memory_space<vmem>>, vector<32x256xf32>
    %cst_9 = arith.constant 0.000000e+00 : f32
    %8 = vector.broadcast %cst_9 : f32 to vector<16x32xf32>
    %cst_10 = arith.constant 0.000000e+00 : f32
    %9 = vector.broadcast %cst_10 : f32 to vector<16x32xf32>
    %c0_i32 = arith.constant 0 : i32
    %c8_i32 = arith.constant 8 : i32
    %10 = arith.addi %c0_i32, %c8_i32 : i32
    %c1_i32 = arith.constant 1 : i32
    %11:2 = scf.for %arg14 = %c0_i32 to %10 step %c1_i32 iter_args(%arg15 = %8, %arg16 = %9) -> (vector<16x32xf32>, vector<16x32xf32>)  : i32 {
      %c7_i32 = arith.constant 7 : i32
      %41 = arith.subi %c7_i32, %arg14 : i32
      %c8_i32_45 = arith.constant 8 : i32
      %42 = arith.muli %arg14, %c8_i32_45 : i32
      %43 = tpu.assume_multiple %42, 8 : i32
      %c8_i32_46 = arith.constant 8 : i32
      %44 = arith.muli %41, %c8_i32_46 : i32
      %45 = tpu.assume_multiple %44, 8 : i32
      %cst_47 = arith.constant dense<0.000000e+00> : vector<16x256xf32>
      %46 = tpu.matmul %arg15, %7, %cst_47 {dimension_numbers = #tpu.dot_dimension_numbers<[1], [0], [0], [1], [0, 0, 1, 1], [], []>} : vector<16x32xf32>, vector<32x256xf32>, vector<16x256xf32> -> vector<16x256xf32>
      %47 = arith.index_cast %43 : i32 to index
      %c0_48 = arith.constant 0 : index
      %48 = vector.load %arg13[%47, %c0_48] : memref<64x256xf32, #tpu.memory_space<vmem>>, vector<8x128xf32>
      %49 = vector.extract_strided_slice %46 {offsets = [0, 0], sizes = [8, 128], strides = [1, 1]} : vector<16x256xf32> to vector<8x128xf32>
      %50 = arith.addf %48, %49 : vector<8x128xf32>
      %51 = arith.index_cast %45 : i32 to index
      %c128 = arith.constant 128 : index
      %52 = vector.load %arg13[%51, %c128] : memref<64x256xf32, #tpu.memory_space<vmem>>, vector<8x128xf32>
      %53 = vector.extract_strided_slice %46 {offsets = [8, 128], sizes = [8, 128], strides = [1, 1]} : vector<16x256xf32> to vector<8x128xf32>
      %54 = arith.addf %52, %53 : vector<8x128xf32>
      %55 = tpu.concatenate %50, %54 in 0 : vector<8x128xf32>, vector<8x128xf32> -> vector<16x128xf32>
      %56 = vector.extract_strided_slice %55 {offsets = [0, 0], sizes = [16, 96], strides = [1, 1]} : vector<16x128xf32> to vector<16x96xf32>
      %57 = arith.negf %56 : vector<16x96xf32>
      %58 = math.exp %57 : vector<16x96xf32>
      %cst_49 = arith.constant 1.000000e+00 : f32
      %59 = vector.broadcast %cst_49 : f32 to vector<16x96xf32>
      %60 = arith.addf %59, %58 : vector<16x96xf32>
      %61 = arith.divf %59, %60 : vector<16x96xf32>
      %62 = vector.extract_strided_slice %61 {offsets = [0, 0], sizes = [16, 32], strides = [1, 1]} : vector<16x96xf32> to vector<16x32xf32>
      %63 = vector.extract_strided_slice %61 {offsets = [0, 32], sizes = [16, 32], strides = [1, 1]} : vector<16x96xf32> to vector<16x32xf32>
      %64 = vector.extract_strided_slice %61 {offsets = [0, 64], sizes = [16, 32], strides = [1, 1]} : vector<16x96xf32> to vector<16x32xf32>
      %65 = vector.extract_strided_slice %55 {offsets = [0, 96], sizes = [16, 32], strides = [1, 1]} : vector<16x128xf32> to vector<16x32xf32>
      %66 = math.tanh %65 : vector<16x32xf32>
      %67 = arith.mulf %63, %arg16 : vector<16x32xf32>
      %68 = arith.mulf %62, %66 : vector<16x32xf32>
      %69 = arith.addf %67, %68 : vector<16x32xf32>
      %70 = math.tanh %69 : vector<16x32xf32>
      %71 = arith.mulf %64, %70 : vector<16x32xf32>
      %72 = vector.extract_strided_slice %71 {offsets = [0, 0], sizes = [8, 32], strides = [1, 1]} : vector<16x32xf32> to vector<8x32xf32>
      %73 = arith.index_cast %43 : i32 to index
      %c0_50 = arith.constant 0 : index
      %74 = vector.load %arg11[%73, %c0_50] : memref<64x32xf32, #tpu.memory_space<vmem>>, vector<8x32xf32>
      tpu.vector_store %arg11[%73, %c0_50], %72 {strides = array<i32>} : memref<64x32xf32, #tpu.memory_space<vmem>>, vector<8x32xf32>,
      %75 = vector.extract_strided_slice %71 {offsets = [8, 0], sizes = [8, 32], strides = [1, 1]} : vector<16x32xf32> to vector<8x32xf32>
      %76 = arith.index_cast %45 : i32 to index
      %c0_51 = arith.constant 0 : index
      %77 = vector.load %arg12[%76, %c0_51] : memref<64x32xf32, #tpu.memory_space<vmem>>, vector<8x32xf32>
      tpu.vector_store %arg12[%76, %c0_51], %75 {strides = array<i32>} : memref<64x32xf32, #tpu.memory_space<vmem>>, vector<8x32xf32>,
      scf.yield %71, %69 : vector<16x32xf32>, vector<16x32xf32>
    }
    %c8_i32_11 = arith.constant 8 : i32
    %c0_12 = arith.constant 0 : index
    %c0_13 = arith.constant 0 : index
    %12 = vector.load %arg11[%c0_12, %c0_13] : memref<64x32xf32, #tpu.memory_space<vmem>>, vector<64x32xf32>
    %13 = arith.truncf %12 : vector<64x32xf32> to vector<64x32xbf16>
    %c0_14 = arith.constant 0 : index
    %c0_15 = arith.constant 0 : index
    %14 = vector.load %arg12[%c0_14, %c0_15] : memref<64x32xf32, #tpu.memory_space<vmem>>, vector<64x32xf32>
    %15 = arith.truncf %14 : vector<64x32xf32> to vector<64x32xbf16>
    %c0_16 = arith.constant 0 : index
    %c0_17 = arith.constant 0 : index
    %16 = vector.load %arg4[%c0_16, %c0_17] : memref<32x256xbf16, #tpu.memory_space<vmem>>, vector<32x256xbf16>
    %cst_18 = arith.constant dense<0.000000e+00> : vector<64x256xf32>
    %17 = tpu.matmul %13, %16, %cst_18 {dimension_numbers = #tpu.dot_dimension_numbers<[1], [0], [0], [1], [0, 0, 1, 1], [], []>} : vector<64x32xbf16>, vector<32x256xbf16>, vector<64x256xf32> -> vector<64x256xf32>
    %c0_19 = arith.constant 0 : index
    %c0_20 = arith.constant 0 : index
    %18 = vector.load %arg5[%c0_19, %c0_20] : memref<32x256xbf16, #tpu.memory_space<vmem>>, vector<32x256xbf16>
    %cst_21 = arith.constant dense<0.000000e+00> : vector<64x256xf32>
    %19 = tpu.matmul %15, %18, %cst_21 {dimension_numbers = #tpu.dot_dimension_numbers<[1], [0], [0], [1], [0, 0, 1, 1], [], []>} : vector<64x32xbf16>, vector<32x256xbf16>, vector<64x256xf32> -> vector<64x256xf32>
    %20 = arith.addf %17, %19 : vector<64x256xf32>
    %c0_22 = arith.constant 0 : index
    %c0_23 = arith.constant 0 : index
    %21 = vector.load %arg7[%c0_22, %c0_23] : memref<1x256xf32, #tpu.memory_space<vmem>>, vector<1x256xf32>
    %22 = vector.broadcast %21 : vector<1x256xf32> to vector<64x256xf32>
    %23 = arith.addf %20, %22 : vector<64x256xf32>
    %c0_24 = arith.constant 0 : index
    %c0_25 = arith.constant 0 : index
    %24 = vector.load %arg13[%c0_24, %c0_25] : memref<64x256xf32, #tpu.memory_space<vmem>>, vector<64x256xf32>
    tpu.vector_store %arg13[%c0_24, %c0_25], %23 {strides = array<i32>} : memref<64x256xf32, #tpu.memory_space<vmem>>, vector<64x256xf32>,
    %c0_26 = arith.constant 0 : index
    %c0_27 = arith.constant 0 : index
    %25 = vector.load %arg6[%c0_26, %c0_27] : memref<32x256xf32, #tpu.memory_space<vmem>>, vector<32x256xf32>
    %cst_28 = arith.constant 0.000000e+00 : f32
    %26 = vector.broadcast %cst_28 : f32 to vector<16x32xf32>
    %cst_29 = arith.constant 0.000000e+00 : f32
    %27 = vector.broadcast %cst_29 : f32 to vector<16x32xf32>
    %c0_i32_30 = arith.constant 0 : i32
    %c8_i32_31 = arith.constant 8 : i32
    %28 = arith.addi %c0_i32_30, %c8_i32_31 : i32
    %c1_i32_32 = arith.constant 1 : i32
    %29:2 = scf.for %arg14 = %c0_i32_30 to %28 step %c1_i32_32 iter_args(%arg15 = %26, %arg16 = %27) -> (vector<16x32xf32>, vector<16x32xf32>)  : i32 {
      %c7_i32 = arith.constant 7 : i32
      %41 = arith.subi %c7_i32, %arg14 : i32
      %c8_i32_45 = arith.constant 8 : i32
      %42 = arith.muli %arg14, %c8_i32_45 : i32
      %43 = tpu.assume_multiple %42, 8 : i32
      %c8_i32_46 = arith.constant 8 : i32
      %44 = arith.muli %41, %c8_i32_46 : i32
      %45 = tpu.assume_multiple %44, 8 : i32
      %cst_47 = arith.constant dense<0.000000e+00> : vector<16x256xf32>
      %46 = tpu.matmul %arg15, %25, %cst_47 {dimension_numbers = #tpu.dot_dimension_numbers<[1], [0], [0], [1], [0, 0, 1, 1], [], []>} : vector<16x32xf32>, vector<32x256xf32>, vector<16x256xf32> -> vector<16x256xf32>
      %47 = arith.index_cast %43 : i32 to index
      %c0_48 = arith.constant 0 : index
      %48 = vector.load %arg13[%47, %c0_48] : memref<64x256xf32, #tpu.memory_space<vmem>>, vector<8x128xf32>
      %49 = vector.extract_strided_slice %46 {offsets = [0, 0], sizes = [8, 128], strides = [1, 1]} : vector<16x256xf32> to vector<8x128xf32>
      %50 = arith.addf %48, %49 : vector<8x128xf32>
      %51 = arith.index_cast %45 : i32 to index
      %c128 = arith.constant 128 : index
      %52 = vector.load %arg13[%51, %c128] : memref<64x256xf32, #tpu.memory_space<vmem>>, vector<8x128xf32>
      %53 = vector.extract_strided_slice %46 {offsets = [8, 128], sizes = [8, 128], strides = [1, 1]} : vector<16x256xf32> to vector<8x128xf32>
      %54 = arith.addf %52, %53 : vector<8x128xf32>
      %55 = tpu.concatenate %50, %54 in 0 : vector<8x128xf32>, vector<8x128xf32> -> vector<16x128xf32>
      %56 = vector.extract_strided_slice %55 {offsets = [0, 0], sizes = [16, 96], strides = [1, 1]} : vector<16x128xf32> to vector<16x96xf32>
      %57 = arith.negf %56 : vector<16x96xf32>
      %58 = math.exp %57 : vector<16x96xf32>
      %cst_49 = arith.constant 1.000000e+00 : f32
      %59 = vector.broadcast %cst_49 : f32 to vector<16x96xf32>
      %60 = arith.addf %59, %58 : vector<16x96xf32>
      %61 = arith.divf %59, %60 : vector<16x96xf32>
      %62 = vector.extract_strided_slice %61 {offsets = [0, 0], sizes = [16, 32], strides = [1, 1]} : vector<16x96xf32> to vector<16x32xf32>
      %63 = vector.extract_strided_slice %61 {offsets = [0, 32], sizes = [16, 32], strides = [1, 1]} : vector<16x96xf32> to vector<16x32xf32>
      %64 = vector.extract_strided_slice %61 {offsets = [0, 64], sizes = [16, 32], strides = [1, 1]} : vector<16x96xf32> to vector<16x32xf32>
      %65 = vector.extract_strided_slice %55 {offsets = [0, 96], sizes = [16, 32], strides = [1, 1]} : vector<16x128xf32> to vector<16x32xf32>
      %66 = math.tanh %65 : vector<16x32xf32>
      %67 = arith.mulf %63, %arg16 : vector<16x32xf32>
      %68 = arith.mulf %62, %66 : vector<16x32xf32>
      %69 = arith.addf %67, %68 : vector<16x32xf32>
      %70 = math.tanh %69 : vector<16x32xf32>
      %71 = arith.mulf %64, %70 : vector<16x32xf32>
      %72 = vector.extract_strided_slice %71 {offsets = [0, 0], sizes = [8, 32], strides = [1, 1]} : vector<16x32xf32> to vector<8x32xf32>
      %73 = arith.index_cast %43 : i32 to index
      %c0_50 = arith.constant 0 : index
      %74 = vector.load %arg11[%73, %c0_50] : memref<64x32xf32, #tpu.memory_space<vmem>>, vector<8x32xf32>
      tpu.vector_store %arg11[%73, %c0_50], %72 {strides = array<i32>} : memref<64x32xf32, #tpu.memory_space<vmem>>, vector<8x32xf32>,
      %75 = vector.extract_strided_slice %71 {offsets = [8, 0], sizes = [8, 32], strides = [1, 1]} : vector<16x32xf32> to vector<8x32xf32>
      %76 = arith.index_cast %45 : i32 to index
      %c0_51 = arith.constant 0 : index
      %77 = vector.load %arg12[%76, %c0_51] : memref<64x32xf32, #tpu.memory_space<vmem>>, vector<8x32xf32>
      tpu.vector_store %arg12[%76, %c0_51], %75 {strides = array<i32>} : memref<64x32xf32, #tpu.memory_space<vmem>>, vector<8x32xf32>,
      scf.yield %71, %69 : vector<16x32xf32>, vector<16x32xf32>
    }
    %c8_i32_33 = arith.constant 8 : i32
    %c0_34 = arith.constant 0 : index
    %c0_35 = arith.constant 0 : index
    %30 = vector.load %arg11[%c0_34, %c0_35] : memref<64x32xf32, #tpu.memory_space<vmem>>, vector<64x32xf32>
    %c0_36 = arith.constant 0 : index
    %c0_37 = arith.constant 0 : index
    %31 = vector.load %arg12[%c0_36, %c0_37] : memref<64x32xf32, #tpu.memory_space<vmem>>, vector<64x32xf32>
    %32 = arith.addf %30, %31 : vector<64x32xf32>
    %c0_38 = arith.constant 0 : index
    %c0_39 = arith.constant 0 : index
    %33 = vector.load %arg9[%c0_38, %c0_39] : memref<64x32xf32, #tpu.memory_space<vmem>>, vector<64x32xf32>
    tpu.vector_store %arg9[%c0_38, %c0_39], %32 {strides = array<i32>} : memref<64x32xf32, #tpu.memory_space<vmem>>, vector<64x32xf32>,
    %34 = vector.extract_strided_slice %29#0 {offsets = [0, 0], sizes = [8, 32], strides = [1, 1]} : vector<16x32xf32> to vector<8x32xf32>
    %35 = vector.extract_strided_slice %29#0 {offsets = [8, 0], sizes = [8, 32], strides = [1, 1]} : vector<16x32xf32> to vector<8x32xf32>
    %36 = arith.addf %34, %35 : vector<8x32xf32>
    %c0_40 = arith.constant 0 : index
    %c0_41 = arith.constant 0 : index
    %37 = vector.load %arg8[%c0_40, %c0_41] : memref<32x32xf32, #tpu.memory_space<vmem>>, vector<32x32xf32>
    %cst_42 = arith.constant dense<0.000000e+00> : vector<8x32xf32>
    %38 = tpu.matmul %36, %37, %cst_42 {dimension_numbers = #tpu.dot_dimension_numbers<[1], [0], [0], [1], [0, 0, 1, 1], [], []>} : vector<8x32xf32>, vector<32x32xf32>, vector<8x32xf32> -> vector<8x32xf32>
    %39 = math.tanh %38 : vector<8x32xf32>
    %c0_43 = arith.constant 0 : index
    %c0_44 = arith.constant 0 : index
    %40 = vector.load %arg10[%c0_43, %c0_44] : memref<8x32xf32, #tpu.memory_space<vmem>>, vector<8x32xf32>
    tpu.vector_store %arg10[%c0_43, %c0_44], %39 {strides = array<i32>} : memref<8x32xf32, #tpu.memory_space<vmem>>, vector<8x32xf32>,
    return
  }
}

</mosaic_0001>

<llo_original>
// kernel: encoder_forward.1
$region0: #{encoder_forward.1}
  #allocation0 [shape = 'u32[]', space=smem, size = 0x4, offset = 0x4, fixed_abs, tag = 'smem constant byte address 0x4 - core index']
  #allocation1 [shape = 'u32[144,128]{1,0:T(1,128)}', space=vmem, size = 0x12000, scoped, tag = 'internal scratch']
  #allocation2 [shape = 'f32[64,32]{1,0:T(8,128)}', space=vmem, size = 0x8000, scoped, tag = 'scratch operand']
  #allocation3 [shape = 'f32[64,32]{1,0:T(8,128)}', space=vmem, size = 0x8000, scoped, tag = 'scratch operand']
  #allocation4 [shape = 'f32[64,256]{1,0:T(8,128)}', space=vmem, size = 0x10000, scoped, tag = 'scratch operand']
  %s0 = inlined_call_operand.vmem [shape: bf16[64,16], index: 0, kind: input, shape index: {}]
  %s1 = inlined_call_operand.hbm [shape: bf16[16,256], index: 1, kind: input, shape index: {}]
  %s2 = inlined_call_operand.vmem [shape: f32[32,256], index: 2, kind: input, shape index: {}]
  %s3 = inlined_call_operand.vmem [shape: f32[1,256], index: 3, kind: input, shape index: {}]
  %s4 = inlined_call_operand.vmem [shape: bf16[32,256], index: 4, kind: input, shape index: {}]
  %s5 = inlined_call_operand.hbm [shape: bf16[32,256], index: 5, kind: input, shape index: {}]
  %s6 = inlined_call_operand.hbm [shape: f32[32,256], index: 6, kind: input, shape index: {}]
  %s7 = inlined_call_operand.vmem [shape: f32[1,256], index: 7, kind: input, shape index: {}]
  %s8 = inlined_call_operand.hbm [shape: f32[32,32], index: 8, kind: input, shape index: {}]
  %s9 = inlined_call_operand.vmem [shape: f32[64,32], index: 9, kind: output, shape index: {0}]
  %s10 = inlined_call_operand.vmem [shape: f32[8,32], index: 10, kind: output, shape index: {1}]
  %11 = xla_tuple %s9, %s10
  %s12 = sld [smem:[#allocation0]]
  $region84: #{encoder_forward.1} parent=0
    _
  %s14 = ssub.s32 1, %s12
  %s15 = scalar_select 0, %s14, %s12
  $region1: #{encoder_forward.1} parent=0
    #allocation5 [shape = 'u8[8192]{0}', space=vmem, size = 0x2000, scoped, tag = 'input window, operand 1, single buffered']
    #allocation6 [shape = 's32[1]{0}', space=sflag, size = 0x4, scoped, tag = 'scoped memory for encoder_forward.1']
    #allocation7 [shape = 'u8[16384]{0}', space=vmem, size = 0x4000, scoped, tag = 'input window, operand 5, single buffered']
    #allocation8 [shape = 's32[1]{0}', space=sflag, size = 0x4, scoped, tag = 'scoped memory for encoder_forward.1']
    #allocation9 [shape = 'u8[32768]{0}', space=vmem, size = 0x8000, scoped, tag = 'input window, operand 6, single buffered']
    #allocation10 [shape = 'u8[16384]{0}', space=vmem, size = 0x4000, scoped, tag = 'input window, operand 8, single buffered']
    #allocation11 [shape = 's32[1]{0}', space=sflag, size = 0x4, scoped, tag = 'scoped memory for encoder_forward.1']
    %16 = vsyncpa [#allocation6], 0
    %17 = vsyncpa [#allocation8], 0
    %18 = vsyncpa [#allocation11], 0
    // Predicated region
    $region2: #{encoder_forward.1} parent=1 // pred_check
      _
    $region3: #{encoder_forward.1} parent=1 // pred_check_branch
      %20 = sbr.rel (0) target = $region5
    $region4: #{encoder_forward.1} parent=1 // pred_region
      _
    $region5: #{encoder_forward.1} parent=1 // pred_fallthru
      _
    // Predicated region
    $region6: #{encoder_forward.1} parent=1 // pred_check
      _
    $region7: #{encoder_forward.1} parent=1 // pred_check_branch
      %22 = sbr.rel (0) target = $region9
    $region8: #{encoder_forward.1} parent=1 // pred_region
      %s24 = ssub.s32 256, 256
      %25 = vsyncadd [#allocation6], %s24
      %s26 = sshll.u32 [#allocation5], 4
      %s27 = int_to_ptr.vmem [resolvable:$true] %s26
      %32 = dma.hbm_to_vmem [thread:$0]  %s1, 256, %s27, [#allocation6], 128, 128, 8
    $region9: #{encoder_forward.1} parent=1 // pred_fallthru
      _
    // Predicated region
    $region10: #{encoder_forward.1} parent=1 // pred_check
      _
    $region11: #{encoder_forward.1} parent=1 // pred_check_branch
      %34 = sbr.rel (0) target = $region13
    $region12: #{encoder_forward.1} parent=1 // pred_region
      _
    $region13: #{encoder_forward.1} parent=1 // pred_fallthru
      _
    // Predicated region
    $region14: #{encoder_forward.1} parent=1 // pred_check
      _
    $region15: #{encoder_forward.1} parent=1 // pred_check_branch
      %36 = sbr.rel (0) target = $region17
    $region16: #{encoder_forward.1} parent=1 // pred_region
      _
    $region17: #{encoder_forward.1} parent=1 // pred_fallthru
      _
    // Predicated region
    $region18: #{encoder_forward.1} parent=1 // pred_check
      _
    $region19: #{encoder_forward.1} parent=1 // pred_check_branch
      %38 = sbr.rel (0) target = $region21
    $region20: #{encoder_forward.1} parent=1 // pred_region
      _
    $region21: #{encoder_forward.1} parent=1 // pred_fallthru
      _
    // Predicated region
    $region22: #{encoder_forward.1} parent=1 // pred_check
      _
    $region23: #{encoder_forward.1} parent=1 // pred_check_branch
      %40 = sbr.rel (0) target = $region25
    $region24: #{encoder_forward.1} parent=1 // pred_region
      %s42 = ssub.s32 512, 512
      %43 = vsyncadd [#allocation8], %s42
      %s44 = sshll.u32 [#allocation7], 4
      %s45 = int_to_ptr.vmem [resolvable:$true] %s44
      %50 = dma.hbm_to_vmem [thread:$0]  %s5, 512, %s45, [#allocation8], 128, 128, 8
    $region25: #{encoder_forward.1} parent=1 // pred_fallthru
      _
    // Predicated region
    $region26: #{encoder_forward.1} parent=1 // pred_check
      _
    $region27: #{encoder_forward.1} parent=1 // pred_check_branch
      %52 = sbr.rel (0) target = $region29
    $region28: #{encoder_forward.1} parent=1 // pred_region
      %s54 = ssub.s32 1024, 1024
      %55 = vsyncadd [#allocation8], %s54
      %s56 = sshll.u32 [#allocation9], 4
      %s57 = int_to_ptr.vmem [resolvable:$true] %s56
      %62 = dma.hbm_to_vmem [thread:$0]  %s6, 1024, %s57, [#allocation8], 256, 256, 16
    $region29: #{encoder_forward.1} parent=1 // pred_fallthru
      _
    // Predicated region
    $region30: #{encoder_forward.1} parent=1 // pred_check
      _
    $region31: #{encoder_forward.1} parent=1 // pred_check_branch
      %64 = sbr.rel (0) target = $region33
    $region32: #{encoder_forward.1} parent=1 // pred_region
      _
    $region33: #{encoder_forward.1} parent=1 // pred_fallthru
      _
    // Predicated region
    $region34: #{encoder_forward.1} parent=1 // pred_check
      _
    $region35: #{encoder_forward.1} parent=1 // pred_check_branch
      %66 = sbr.rel (0) target = $region37
    $region36: #{encoder_forward.1} parent=1 // pred_region
      %s68 = ssub.s32 512, 512
      %69 = vsyncadd [#allocation11], %s68
      %s70 = sshll.u32 [#allocation10], 4
      %s71 = int_to_ptr.vmem [resolvable:$true] %s70
      %76 = dma.hbm_to_vmem [thread:$0]  %s8, 512, %s71, [#allocation11], 128, 128, 8
    $region37: #{encoder_forward.1} parent=1 // pred_fallthru
      _
    // Predicated region
    $region38: #{encoder_forward.1} parent=1 // pred_check
      _
    $region39: #{encoder_forward.1} parent=1 // pred_check_branch
      %78 = sbr.rel (0) target = $region41
    $region40: #{encoder_forward.1} parent=1 // pred_region
      %79 = dma.done [#allocation6], 256
    $region41: #{encoder_forward.1} parent=1 // pred_fallthru
      _
    // Predicated region
    $region42: #{encoder_forward.1} parent=1 // pred_check
      _
    $region43: #{encoder_forward.1} parent=1 // pred_check_branch
      %81 = sbr.rel (0) target = $region45
    $region44: #{encoder_forward.1} parent=1 // pred_region
      %82 = dma.done [#allocation8], 512
    $region45: #{encoder_forward.1} parent=1 // pred_fallthru
      _
    // Predicated region
    $region46: #{encoder_forward.1} parent=1 // pred_check
      _
    $region47: #{encoder_forward.1} parent=1 // pred_check_branch
      %84 = sbr.rel (0) target = $region49
    $region48: #{encoder_forward.1} parent=1 // pred_region
      %85 = dma.done [#allocation8], 1024
    $region49: #{encoder_forward.1} parent=1 // pred_fallthru
      _
    // Predicated region
    $region50: #{encoder_forward.1} parent=1 // pred_check
      _
    $region51: #{encoder_forward.1} parent=1 // pred_check_branch
      %87 = sbr.rel (0) target = $region53
    $region52: #{encoder_forward.1} parent=1 // pred_region
      %88 = dma.done [#allocation11], 512
    $region53: #{encoder_forward.1} parent=1 // pred_fallthru
      _
    %v90 = vld [vmem:[%s0] sm:$0xf]
    %v91 = vld [vmem:[%s0 + $0x4] sm:$0xf]
    %v92 = vld [vmem:[%s0 + $0x8] sm:$0xf]
    %v93 = vld [vmem:[%s0 + $0xc] sm:$0xf]
    %v94 = vld [vmem:[%s0 + $0x10] sm:$0xf]
    %v95 = vld [vmem:[%s0 + $0x14] sm:$0xf]
    %v96 = vld [vmem:[%s0 + $0x18] sm:$0xf]
    %v97 = vld [vmem:[%s0 + $0x1c] sm:$0xf]
    %v98 = vld [vmem:[#allocation5] sm:$0xff]
    %v99 = vld [vmem:[#allocation5 + $0x8] sm:$0xff]
    %v100 = vld [vmem:[%s3] sm:$0x3]
    %v102 = vlaneseq
    %v103 = vshrl.u32 %v102, 7
    %v104 = vsub.s32 0, %v103
    %v105 = vrot.slane %v100, %v104
    %v106 = vlaneseq
    %v107 = vshrl.u32 %v106, 7
    %v108 = vsub.s32 1, %v107
    %v109 = vrot.slane %v100, %v108
    %v120 = vunpack.c.l.b16 %v90
    %v121 = vunpack.c.l.b16 %v91
    %v122 = vunpack.c.l.b16 %v92
    %v123 = vunpack.c.l.b16 %v93
    %v124 = vunpack.c.l.b16 %v94
    %v125 = vunpack.c.l.b16 %v95
    %v126 = vunpack.c.l.b16 %v96
    %v127 = vunpack.c.l.b16 %v97
    %v128 = vpack.c.b16 %v121, %v120
    %v129 = vpack.c.b16 %v123, %v122
    %v130 = vpack.c.b16 %v125, %v124
    %v131 = vpack.c.b16 %v127, %v126
    %v134 = vunpack.c.l.b16 %v98
    %v135 = vunpack.c.h.b16 %v98
    %v136 = vunpack.c.l.b16 %v99
    %v137 = vunpack.c.h.b16 %v99
    %v138 = vpack.c.b16 %v136, %v134
    %v139 = vpack.c.b16 %v137, %v135
    %vm142 = vcmask 130048
    %v144 = vsel %vm142, %v128, 0
    %v147 = vsel %vm142, %v129, 0
    %v150 = vsel %vm142, %v130, 0
    %v153 = vsel %vm142, %v131, 0
    %155 = vmatprep.subr.bf16.mxu0 %v139
    %156 = vmatpush1.bf16.msra.mxu0 %v138
    %157 = vmatprep.subr.bf16.mxu0 0
    %158 = vmatpush1.bf16.msra.mxu0 0
    %159 = vmatprep.subr.bf16.mxu0 0
    %160 = vmatpush1.bf16.msra.mxu0 0
    %161 = vmatprep.subr.bf16.mxu0 0
    %162 = vmatpush1.bf16.msra.mxu0 0
    %163 = vmatprep.subr.bf16.mxu0 0
    %164 = vmatpush1.bf16.msra.mxu0 0
    %165 = vmatprep.subr.bf16.mxu0 0
    %166 = vmatpush1.bf16.msra.mxu0 0
    %167 = vmatprep.subr.bf16.mxu0 0
    %168 = vmatpush1.bf16.msra.mxu0 0
    %169 = vmatprep.subr.bf16.mxu0 0
    %170 = vmatpush1.bf16.msra.mxu0 0
    %171 = vmatprep.subr.bf16.mxu0 0
    %172 = vmatpush1.bf16.msra.mxu0 0
    %173 = vmatprep.subr.bf16.mxu0 0
    %174 = vmatpush1.bf16.msra.mxu0 0
    %175 = vmatprep.subr.bf16.mxu0 0
    %176 = vmatpush1.bf16.msra.mxu0 0
    %177 = vmatprep.subr.bf16.mxu0 0
    %178 = vmatpush1.bf16.msra.mxu0 0
    %179 = vmatprep.subr.bf16.mxu0 0
    %180 = vmatpush1.bf16.msra.mxu0 0
    %181 = vmatprep.subr.bf16.mxu0 0
    %182 = vmatpush1.bf16.msra.mxu0 0
    %183 = vmatprep.subr.bf16.mxu0 0
    %184 = vmatpush1.bf16.msra.mxu0 0
    %185 = vmatprep.subr.bf16.mxu0 0
    %186 = vmatpush1.bf16.msra.mxu0 0
    %187 = vmatprep.mubr.bf16.mxu0 0
    %188 = vmatmul.mubr.bf16.gmra.mrb[0].mxu0 %v144
    %v189 = vpop.f32.mrb[0].mxu0
    %v190 = vadd.f32 %v105, %v189
    %v191 = vpop.f32.mrb[0].mxu0
    %v192 = vadd.f32 %v109, %v191
    %v193 = vpop.f32.mrb[0].mxu0
    %v194 = vadd.f32 %v105, %v193
    %v195 = vpop.f32.mrb[0].mxu0
    %v196 = vadd.f32 %v109, %v195
    %197 = vmatprep.mubr.bf16.mxu0 0
    %198 = vmatmul.mubr.bf16.gmra.mrb[0].mxu0 %v147
    %v199 = vpop.f32.mrb[0].mxu0
    %v200 = vadd.f32 %v105, %v199
    %v201 = vpop.f32.mrb[0].mxu0
    %v202 = vadd.f32 %v109, %v201
    %v203 = vpop.f32.mrb[0].mxu0
    %v204 = vadd.f32 %v105, %v203
    %v205 = vpop.f32.mrb[0].mxu0
    %v206 = vadd.f32 %v109, %v205
    %207 = vmatprep.mubr.bf16.mxu0 0
    %208 = vmatmul.mubr.bf16.gmra.mrb[0].mxu0 %v150
    %v209 = vpop.f32.mrb[0].mxu0
    %v210 = vadd.f32 %v105, %v209
    %v211 = vpop.f32.mrb[0].mxu0
    %v212 = vadd.f32 %v109, %v211
    %v213 = vpop.f32.mrb[0].mxu0
    %v214 = vadd.f32 %v105, %v213
    %v215 = vpop.f32.mrb[0].mxu0
    %v216 = vadd.f32 %v109, %v215
    %217 = vmatprep.mubr.bf16.mxu0 0
    %218 = vmatmul.mubr.bf16.gmra.mrb[0].mxu0 %v153
    %v219 = vpop.f32.mrb[0].mxu0
    %v220 = vadd.f32 %v105, %v219
    %v221 = vpop.f32.mrb[0].mxu0
    %v222 = vadd.f32 %v109, %v221
    %v223 = vpop.f32.mrb[0].mxu0
    %v224 = vadd.f32 %v105, %v223
    %v225 = vpop.f32.mrb[0].mxu0
    %v226 = vadd.f32 %v109, %v225
    %227 = vdwg.mxu0
    %228 = vst [vmem:[#allocation4] sm:$0xff] %v190
    %229 = vst [vmem:[#allocation4 + $0x8] sm:$0xff] %v192
    %230 = vst [vmem:[#allocation4 + $0x10] sm:$0xff] %v194
    %231 = vst [vmem:[#allocation4 + $0x18] sm:$0xff] %v196
    %232 = vst [vmem:[#allocation4 + $0x20] sm:$0xff] %v200
    %233 = vst [vmem:[#allocation4 + $0x28] sm:$0xff] %v202
    %234 = vst [vmem:[#allocation4 + $0x30] sm:$0xff] %v204
    %235 = vst [vmem:[#allocation4 + $0x38] sm:$0xff] %v206
    %236 = vst [vmem:[#allocation4 + $0x40] sm:$0xff] %v210
    %237 = vst [vmem:[#allocation4 + $0x48] sm:$0xff] %v212
    %238 = vst [vmem:[#allocation4 + $0x50] sm:$0xff] %v214
    %239 = vst [vmem:[#allocation4 + $0x58] sm:$0xff] %v216
    %240 = vst [vmem:[#allocation4 + $0x60] sm:$0xff] %v220
    %241 = vst [vmem:[#allocation4 + $0x68] sm:$0xff] %v222
    %242 = vst [vmem:[#allocation4 + $0x70] sm:$0xff] %v224
    %243 = vst [vmem:[#allocation4 + $0x78] sm:$0xff] %v226
    %v244 = vld [vmem:[%s2] sm:$0xff]
    %v245 = vld [vmem:[%s2 + $0x8] sm:$0xff]
    %v246 = vld [vmem:[%s2 + $0x10] sm:$0xff]
    %v247 = vld [vmem:[%s2 + $0x18] sm:$0xff]
    %v248 = vld [vmem:[%s2 + $0x20] sm:$0xff]
    %v249 = vld [vmem:[%s2 + $0x28] sm:$0xff]
    %v250 = vld [vmem:[%s2 + $0x30] sm:$0xff]
    %v251 = vld [vmem:[%s2 + $0x38] sm:$0xff]
    loop: start=0, step=1, limit=8
    $region54: #{encoder_forward.1} parent=1 // loop_pre_header
      _
    $region55: #{encoder_forward.1} parent=1 // loop_header
      %s253 = sphi 0, %s257
      %p254 = scmp.ge.s32.totalorder %s253, 8
      %v258 = vphi 0.0, %v411
      %v259 = vphi 0.0, %v412
      %v260 = vphi 0.0, %v399
      %v261 = vphi 0.0, %v400
    $region56: #{encoder_forward.1} parent=1 // loop_header_branch
      %256 = sbr.rel (%p254) target = $region60
    $region57: #{encoder_forward.1} parent=1 // loop_body
      %s262 = ssub.s32 7, %s253
      %s263 = smul.u32 %s253, 8
      %s264 = smul.u32 %s262, 8
      %267 = vrot.lane.b32.xlu0 %v258, 64
      %v268 = vpop.permute.xlu0 %267
      %269 = vrot.lane.b32.xlu0 %v259, 64
      %v270 = vpop.permute.xlu0 %269
      %vm271 = vcmask 261120
      %v272 = vsel %vm271, %v268, 0
      %v274 = vsel %vm271, %v270, 0
      %276 = vmatprep.subr.mxu0 %v245
      %277 = vmatpush1.msra.mxu0 %v244
      %278 = vmatprep.subr.mxu0 %v247
      %279 = vmatpush1.msra.mxu0 %v246
      %280 = vmatprep.subr.mxu0 %v249
      %281 = vmatpush1.msra.mxu0 %v248
      %282 = vmatprep.subr.mxu0 %v251
      %283 = vmatpush1.msra.mxu0 %v250
      %284 = vmatprep.subr.mxu0 0.0
      %285 = vmatpush1.msra.mxu0 0.0
      %286 = vmatprep.subr.mxu0 0.0
      %287 = vmatpush1.msra.mxu0 0.0
      %288 = vmatprep.subr.mxu0 0.0
      %289 = vmatpush1.msra.mxu0 0.0
      %290 = vmatprep.subr.mxu0 0.0
      %291 = vmatpush1.msra.mxu0 0.0
      %292 = vmatprep.subr.mxu0 0.0
      %293 = vmatpush1.msra.mxu0 0.0
      %294 = vmatprep.subr.mxu0 0.0
      %295 = vmatpush1.msra.mxu0 0.0
      %296 = vmatprep.subr.mxu0 0.0
      %297 = vmatpush1.msra.mxu0 0.0
      %298 = vmatprep.subr.mxu0 0.0
      %299 = vmatpush1.msra.mxu0 0.0
      %300 = vmatprep.subr.mxu0 0.0
      %301 = vmatpush1.msra.mxu0 0.0
      %302 = vmatprep.subr.mxu0 0.0
      %303 = vmatpush1.msra.mxu0 0.0
      %304 = vmatprep.subr.mxu0 0.0
      %305 = vmatpush1.msra.mxu0 0.0
      %306 = vmatprep.subr.mxu0 0.0
      %307 = vmatpush1.msra.mxu0 0.0
      %308 = vmatprep.subr.mxu0 0.0
      %309 = vmatpush1.msra.mxu0 0.0
      %310 = vmatprep.subr.mxu0 0.0
      %311 = vmatpush1.msra.mxu0 0.0
      %312 = vmatprep.subr.mxu0 0.0
      %313 = vmatpush1.msra.mxu0 0.0
      %314 = vmatprep.subr.mxu0 0.0
      %315 = vmatpush1.msra.mxu0 0.0
      %316 = vmatprep.subr.mxu0 0.0
      %317 = vmatpush1.msra.mxu0 0.0
      %318 = vmatprep.subr.mxu0 0.0
      %319 = vmatpush1.msra.mxu0 0.0
      %320 = vmatprep.subr.mxu0 0.0
      %321 = vmatpush1.msra.mxu0 0.0
      %322 = vmatprep.subr.mxu0 0.0
      %323 = vmatpush1.msra.mxu0 0.0
      %324 = vmatprep.subr.mxu0 0.0
      %325 = vmatpush1.msra.mxu0 0.0
      %326 = vmatprep.subr.mxu0 0.0
      %327 = vmatpush1.msra.mxu0 0.0
      %328 = vmatprep.subr.mxu0 0.0
      %329 = vmatpush1.msra.mxu0 0.0
      %330 = vmatprep.subr.mxu0 0.0
      %331 = vmatpush1.msra.mxu0 0.0
      %332 = vmatprep.subr.mxu0 0.0
      %333 = vmatpush1.msra.mxu0 0.0
      %334 = vmatprep.subr.mxu0 0.0
      %335 = vmatpush1.msra.mxu0 0.0
      %336 = vmatprep.subr.mxu0 0.0
      %337 = vmatpush1.msra.mxu0 0.0
      %338 = vmatprep.subr.mxu0 0.0
      %339 = vmatpush1.msra.mxu0 0.0
      %340 = vmatprep.mubr.f32.mxu0 0.0
      %341 = vmatmul.mubr.f32.gmra.mrb[0].mxu0 %v272
      %v342 = vpop.f32.mrb[0].mxu0
      %v343 = vadd.f32 0.0, %v342
      %v344 = vpop.f32.mrb[0].mxu0
      %345 = vmatprep.mubr.f32.mxu0 0.0
      %346 = vmatmul.mubr.f32.gmra.mrb[0].mxu0 %v274
      %v347 = vpop.f32.mrb[0].mxu0
      %v348 = vpop.f32.mrb[0].mxu0
      %v349 = vadd.f32 0.0, %v348
      %350 = vdwg.mxu0
      %s351 = sshra.s32 %s263, 3
      %s352 = sand.u32 %s263, 7
      %s353 = smul.u32 %s351, 2
      %s354 = smul.addr %s353, 8
      %s355 = scalar_lea.vmem [#allocation4], %s354
      %v356 = vld [vmem:[%s355] sm:$0xff]
      %v357 = vadd.f32 %v356, %v343
      %s358 = sshra.s32 %s264, 3
      %s359 = sand.u32 %s264, 7
      %s360 = smul.u32 %s358, 2
      %s361 = smul.addr %s360, 8
      %s362 = scalar_lea.vmem [#allocation4], %s361
      %v363 = vld [vmem:[%s362 + $0x8] sm:$0xff]
      %v364 = vadd.f32 %v363, %v349
      %v365 = vxor.u32 %v357, 2147483648
      %v366 = vxor.u32 %v364, 2147483648
      %v367 = vmul.f32 %v365, 1.442695
      %v368 = vpow.pop %v367
      %v369 = vmul.f32 %v366, 1.442695
      %v370 = vpow.pop %v369
      %v371 = vadd.f32 %v368, 1.0
      %v372 = vadd.f32 %v370, 1.0
      %v373 = vrcp.pop %v371
      %v374 = vmul.f32 1.0, %v373
      %v375 = vrcp.pop %v372
      %v376 = vmul.f32 1.0, %v375
      %v377 = vtanh.pop %v357
      %v378 = vtanh.pop %v364
      %v379 = vmul.f32 %v374, %v260
      %v380 = vmul.f32 %v376, %v261
      %383 = vrot.lane.b32.xlu0 %v377, 32
      %v384 = vpop.permute.xlu0 %383
      %385 = vrot.lane.b32.xlu0 %v378, 32
      %v386 = vpop.permute.xlu0 %385
      %v389 = vmul.f32 %v374, %v384
      %v390 = vmul.f32 %v376, %v386
      %393 = vrot.lane.b32.xlu0 %v389, 32
      %v394 = vpop.permute.xlu0 %393
      %395 = vrot.lane.b32.xlu0 %v390, 32
      %v396 = vpop.permute.xlu0 %395
      %v399 = vadd.f32 %v379, %v394
      %v400 = vadd.f32 %v380, %v396
      %v401 = vtanh.pop %v399
      %v402 = vtanh.pop %v400
      %405 = vrot.lane.b32.xlu0 %v401, 32
      %v406 = vpop.permute.xlu0 %405
      %407 = vrot.lane.b32.xlu0 %v402, 32
      %v408 = vpop.permute.xlu0 %407
      %v411 = vmul.f32 %v374, %v406
      %v412 = vmul.f32 %v376, %v408
      %414 = vrot.lane.b32.xlu0 %v411, 64
      %v415 = vpop.permute.xlu0 %414
      %s417 = scalar_lea.vmem [#allocation2], %s263
      %418 = vst.msk [vmem:[%s417] sm:$0xff] %vm271, %v415
      %420 = vrot.lane.b32.xlu0 %v412, 64
      %v421 = vpop.permute.xlu0 %420
      %s423 = scalar_lea.vmem [#allocation3], %s264
      %424 = vst.msk [vmem:[%s423] sm:$0xff] %vm271, %v421
    $region58: #{encoder_forward.1} parent=1 // loop_footer
      %s257 = sadd.s32 1, %s253
    $region59: #{encoder_forward.1} parent=1 // loop_footer_branch
      %252 = sbr.rel target = $region55
    $region60: #{encoder_forward.1} parent=1 // loop_exit
      _
    %v425 = vld [vmem:[#allocation2] sm:$0xff]
    %v426 = vld [vmem:[#allocation2 + $0x8] sm:$0xff]
    %v427 = vld [vmem:[#allocation2 + $0x10] sm:$0xff]
    %v428 = vld [vmem:[#allocation2 + $0x18] sm:$0xff]
    %v429 = vld [vmem:[#allocation2 + $0x20] sm:$0xff]
    %v430 = vld [vmem:[#allocation2 + $0x28] sm:$0xff]
    %v431 = vld [vmem:[#allocation2 + $0x30] sm:$0xff]
    %v432 = vld [vmem:[#allocation2 + $0x38] sm:$0xff]
    %v433 = vpack.c.bf16 %v426, %v425
    %v434 = vpack.c.bf16 %v428, %v427
    %v435 = vpack.c.bf16 %v430, %v429
    %v436 = vpack.c.bf16 %v432, %v431
    %v437 = vld [vmem:[#allocation3] sm:$0xff]
    %v438 = vld [vmem:[#allocation3 + $0x8] sm:$0xff]
    %v439 = vld [vmem:[#allocation3 + $0x10] sm:$0xff]
    %v440 = vld [vmem:[#allocation3 + $0x18] sm:$0xff]
    %v441 = vld [vmem:[#allocation3 + $0x20] sm:$0xff]
    %v442 = vld [vmem:[#allocation3 + $0x28] sm:$0xff]
    %v443 = vld [vmem:[#allocation3 + $0x30] sm:$0xff]
    %v444 = vld [vmem:[#allocation3 + $0x38] sm:$0xff]
    %v445 = vpack.c.bf16 %v438, %v437
    %v446 = vpack.c.bf16 %v440, %v439
    %v447 = vpack.c.bf16 %v442, %v441
    %v448 = vpack.c.bf16 %v444, %v443
    %v449 = vld [vmem:[%s4] sm:$0xff]
    %v450 = vld [vmem:[%s4 + $0x8] sm:$0xff]
    %v451 = vld [vmem:[%s4 + $0x10] sm:$0xff]
    %v452 = vld [vmem:[%s4 + $0x18] sm:$0xff]
    %v453 = vld [vmem:[#allocation7] sm:$0xff]
    %v454 = vld [vmem:[#allocation7 + $0x8] sm:$0xff]
    %v455 = vld [vmem:[#allocation7 + $0x10] sm:$0xff]
    %v456 = vld [vmem:[#allocation7 + $0x18] sm:$0xff]
    %v461 = vunpack.c.l.b16 %v453
    %v462 = vunpack.c.h.b16 %v453
    %v463 = vunpack.c.l.b16 %v454
    %v464 = vunpack.c.h.b16 %v454
    %v465 = vunpack.c.l.b16 %v455
    %v466 = vunpack.c.h.b16 %v455
    %v467 = vunpack.c.l.b16 %v456
    %v468 = vunpack.c.h.b16 %v456
    %v469 = vpack.c.b16 %v463, %v461
    %v470 = vpack.c.b16 %v464, %v462
    %v471 = vpack.c.b16 %v467, %v465
    %v472 = vpack.c.b16 %v468, %v466
    %vm477 = vcmask 261120
    %v479 = vsel %vm477, %v445, 0
    %v482 = vsel %vm477, %v446, 0
    %v485 = vsel %vm477, %v447, 0
    %v488 = vsel %vm477, %v448, 0
    %490 = vmatprep.subr.bf16.mxu0 %v470
    %491 = vmatpush1.bf16.msra.mxu0 %v469
    %492 = vmatprep.subr.bf16.mxu0 %v472
    %493 = vmatpush1.bf16.msra.mxu0 %v471
    %494 = vmatprep.subr.bf16.mxu0 0
    %495 = vmatpush1.bf16.msra.mxu0 0
    %496 = vmatprep.subr.bf16.mxu0 0
    %497 = vmatpush1.bf16.msra.mxu0 0
    %498 = vmatprep.subr.bf16.mxu0 0
    %499 = vmatpush1.bf16.msra.mxu0 0
    %500 = vmatprep.subr.bf16.mxu0 0
    %501 = vmatpush1.bf16.msra.mxu0 0
    %502 = vmatprep.subr.bf16.mxu0 0
    %503 = vmatpush1.bf16.msra.mxu0 0
    %504 = vmatprep.subr.bf16.mxu0 0
    %505 = vmatpush1.bf16.msra.mxu0 0
    %506 = vmatprep.subr.bf16.mxu0 0
    %507 = vmatpush1.bf16.msra.mxu0 0
    %508 = vmatprep.subr.bf16.mxu0 0
    %509 = vmatpush1.bf16.msra.mxu0 0
    %510 = vmatprep.subr.bf16.mxu0 0
    %511 = vmatpush1.bf16.msra.mxu0 0
    %512 = vmatprep.subr.bf16.mxu0 0
    %513 = vmatpush1.bf16.msra.mxu0 0
    %514 = vmatprep.subr.bf16.mxu0 0
    %515 = vmatpush1.bf16.msra.mxu0 0
    %516 = vmatprep.subr.bf16.mxu0 0
    %517 = vmatpush1.bf16.msra.mxu0 0
    %518 = vmatprep.subr.bf16.mxu0 0
    %519 = vmatpush1.bf16.msra.mxu0 0
    %520 = vmatprep.subr.bf16.mxu0 0
    %521 = vmatpush1.bf16.msra.mxu0 0
    %522 = vmatprep.mubr.bf16.mxu0 0
    %523 = vmatmul.mubr.bf16.gmra.mrb[0].mxu0 %v479
    %v524 = vpop.f32.mrb[0].mxu0
    %v525 = vadd.f32 0.0, %v524
    %v526 = vpop.f32.mrb[0].mxu0
    %v527 = vadd.f32 0.0, %v526
    %v528 = vpop.f32.mrb[0].mxu0
    %v529 = vadd.f32 0.0, %v528
    %v530 = vpop.f32.mrb[0].mxu0
    %v531 = vadd.f32 0.0, %v530
    %532 = vmatprep.mubr.bf16.mxu0 0
    %533 = vmatmul.mubr.bf16.gmra.mrb[0].mxu0 %v482
    %v534 = vpop.f32.mrb[0].mxu0
    %v535 = vadd.f32 0.0, %v534
    %v536 = vpop.f32.mrb[0].mxu0
    %v537 = vadd.f32 0.0, %v536
    %v538 = vpop.f32.mrb[0].mxu0
    %v539 = vadd.f32 0.0, %v538
    %v540 = vpop.f32.mrb[0].mxu0
    %v541 = vadd.f32 0.0, %v540
    %542 = vmatprep.mubr.bf16.mxu0 0
    %543 = vmatmul.mubr.bf16.gmra.mrb[0].mxu0 %v485
    %v544 = vpop.f32.mrb[0].mxu0
    %v545 = vadd.f32 0.0, %v544
    %v546 = vpop.f32.mrb[0].mxu0
    %v547 = vadd.f32 0.0, %v546
    %v548 = vpop.f32.mrb[0].mxu0
    %v549 = vadd.f32 0.0, %v548
    %v550 = vpop.f32.mrb[0].mxu0
    %v551 = vadd.f32 0.0, %v550
    %552 = vmatprep.mubr.bf16.mxu0 0
    %553 = vmatmul.mubr.bf16.gmra.mrb[0].mxu0 %v488
    %v554 = vpop.f32.mrb[0].mxu0
    %v555 = vadd.f32 0.0, %v554
    %v556 = vpop.f32.mrb[0].mxu0
    %v557 = vadd.f32 0.0, %v556
    %v558 = vpop.f32.mrb[0].mxu0
    %v559 = vadd.f32 0.0, %v558
    %v560 = vpop.f32.mrb[0].mxu0
    %v561 = vadd.f32 0.0, %v560
    %562 = vdwg.mxu0
    %v567 = vunpack.c.l.b16 %v449
    %v568 = vunpack.c.h.b16 %v449
    %v569 = vunpack.c.l.b16 %v450
    %v570 = vunpack.c.h.b16 %v450
    %v571 = vunpack.c.l.b16 %v451
    %v572 = vunpack.c.h.b16 %v451
    %v573 = vunpack.c.l.b16 %v452
    %v574 = vunpack.c.h.b16 %v452
    %v575 = vpack.c.b16 %v569, %v567
    %v576 = vpack.c.b16 %v570, %v568
    %v577 = vpack.c.b16 %v573, %v571
    %v578 = vpack.c.b16 %v574, %v572
    %v584 = vsel %vm477, %v433, 0
    %v587 = vsel %vm477, %v434, 0
    %v590 = vsel %vm477, %v435, 0
    %v593 = vsel %vm477, %v436, 0
    %595 = vmatprep.subr.bf16.mxu0 %v576
    %596 = vmatpush1.bf16.msra.mxu0 %v575
    %597 = vmatprep.subr.bf16.mxu0 %v578
    %598 = vmatpush1.bf16.msra.mxu0 %v577
    %599 = vmatprep.subr.bf16.mxu0 0
    %600 = vmatpush1.bf16.msra.mxu0 0
    %601 = vmatprep.subr.bf16.mxu0 0
    %602 = vmatpush1.bf16.msra.mxu0 0
    %603 = vmatprep.subr.bf16.mxu0 0
    %604 = vmatpush1.bf16.msra.mxu0 0
    %605 = vmatprep.subr.bf16.mxu0 0
    %606 = vmatpush1.bf16.msra.mxu0 0
    %607 = vmatprep.subr.bf16.mxu0 0
    %608 = vmatpush1.bf16.msra.mxu0 0
    %609 = vmatprep.subr.bf16.mxu0 0
    %610 = vmatpush1.bf16.msra.mxu0 0
    %611 = vmatprep.subr.bf16.mxu0 0
    %612 = vmatpush1.bf16.msra.mxu0 0
    %613 = vmatprep.subr.bf16.mxu0 0
    %614 = vmatpush1.bf16.msra.mxu0 0
    %615 = vmatprep.subr.bf16.mxu0 0
    %616 = vmatpush1.bf16.msra.mxu0 0
    %617 = vmatprep.subr.bf16.mxu0 0
    %618 = vmatpush1.bf16.msra.mxu0 0
    %619 = vmatprep.subr.bf16.mxu0 0
    %620 = vmatpush1.bf16.msra.mxu0 0
    %621 = vmatprep.subr.bf16.mxu0 0
    %622 = vmatpush1.bf16.msra.mxu0 0
    %623 = vmatprep.subr.bf16.mxu0 0
    %624 = vmatpush1.bf16.msra.mxu0 0
    %625 = vmatprep.subr.bf16.mxu0 0
    %626 = vmatpush1.bf16.msra.mxu0 0
    %627 = vmatprep.mubr.bf16.mxu0 0
    %628 = vmatmul.mubr.bf16.gmra.mrb[0].mxu0 %v584
    %v629 = vpop.f32.mrb[0].mxu0
    %v630 = vadd.f32 %v525, %v629
    %v631 = vpop.f32.mrb[0].mxu0
    %v632 = vadd.f32 %v527, %v631
    %v633 = vpop.f32.mrb[0].mxu0
    %v634 = vadd.f32 %v529, %v633
    %v635 = vpop.f32.mrb[0].mxu0
    %v636 = vadd.f32 %v531, %v635
    %637 = vmatprep.mubr.bf16.mxu0 0
    %638 = vmatmul.mubr.bf16.gmra.mrb[0].mxu0 %v587
    %v639 = vpop.f32.mrb[0].mxu0
    %v640 = vadd.f32 %v535, %v639
    %v641 = vpop.f32.mrb[0].mxu0
    %v642 = vadd.f32 %v537, %v641
    %v643 = vpop.f32.mrb[0].mxu0
    %v644 = vadd.f32 %v539, %v643
    %v645 = vpop.f32.mrb[0].mxu0
    %v646 = vadd.f32 %v541, %v645
    %647 = vmatprep.mubr.bf16.mxu0 0
    %648 = vmatmul.mubr.bf16.gmra.mrb[0].mxu0 %v590
    %v649 = vpop.f32.mrb[0].mxu0
    %v650 = vadd.f32 %v545, %v649
    %v651 = vpop.f32.mrb[0].mxu0
    %v652 = vadd.f32 %v547, %v651
    %v653 = vpop.f32.mrb[0].mxu0
    %v654 = vadd.f32 %v549, %v653
    %v655 = vpop.f32.mrb[0].mxu0
    %v656 = vadd.f32 %v551, %v655
    %657 = vmatprep.mubr.bf16.mxu0 0
    %658 = vmatmul.mubr.bf16.gmra.mrb[0].mxu0 %v593
    %v659 = vpop.f32.mrb[0].mxu0
    %v660 = vadd.f32 %v555, %v659
    %v661 = vpop.f32.mrb[0].mxu0
    %v662 = vadd.f32 %v557, %v661
    %v663 = vpop.f32.mrb[0].mxu0
    %v664 = vadd.f32 %v559, %v663
    %v665 = vpop.f32.mrb[0].mxu0
    %v666 = vadd.f32 %v561, %v665
    %667 = vdwg.mxu0
    %v668 = vld [vmem:[%s7] sm:$0x3]
    %v670 = vlaneseq
    %v671 = vshrl.u32 %v670, 7
    %v672 = vsub.s32 0, %v671
    %v673 = vrot.slane %v668, %v672
    %v674 = vlaneseq
    %v675 = vshrl.u32 %v674, 7
    %v676 = vsub.s32 1, %v675
    %v677 = vrot.slane %v668, %v676
    %v680 = vadd.f32 %v630, %v673
    %v681 = vadd.f32 %v632, %v677
    %v682 = vadd.f32 %v634, %v673
    %v683 = vadd.f32 %v636, %v677
    %v684 = vadd.f32 %v640, %v673
    %v685 = vadd.f32 %v642, %v677
    %v686 = vadd.f32 %v644, %v673
    %v687 = vadd.f32 %v646, %v677
    %v688 = vadd.f32 %v650, %v673
    %v689 = vadd.f32 %v652, %v677
    %v690 = vadd.f32 %v654, %v673
    %v691 = vadd.f32 %v656, %v677
    %v692 = vadd.f32 %v660, %v673
    %v693 = vadd.f32 %v662, %v677
    %v694 = vadd.f32 %v664, %v673
    %v695 = vadd.f32 %v666, %v677
    %696 = vst [vmem:[#allocation4] sm:$0xff] %v680
    %697 = vst [vmem:[#allocation4 + $0x8] sm:$0xff] %v681
    %698 = vst [vmem:[#allocation4 + $0x10] sm:$0xff] %v682
    %699 = vst [vmem:[#allocation4 + $0x18] sm:$0xff] %v683
    %700 = vst [vmem:[#allocation4 + $0x20] sm:$0xff] %v684
    %701 = vst [vmem:[#allocation4 + $0x28] sm:$0xff] %v685
    %702 = vst [vmem:[#allocation4 + $0x30] sm:$0xff] %v686
    %703 = vst [vmem:[#allocation4 + $0x38] sm:$0xff] %v687
    %704 = vst [vmem:[#allocation4 + $0x40] sm:$0xff] %v688
    %705 = vst [vmem:[#allocation4 + $0x48] sm:$0xff] %v689
    %706 = vst [vmem:[#allocation4 + $0x50] sm:$0xff] %v690
    %707 = vst [vmem:[#allocation4 + $0x58] sm:$0xff] %v691
    %708 = vst [vmem:[#allocation4 + $0x60] sm:$0xff] %v692
    %709 = vst [vmem:[#allocation4 + $0x68] sm:$0xff] %v693
    %710 = vst [vmem:[#allocation4 + $0x70] sm:$0xff] %v694
    %711 = vst [vmem:[#allocation4 + $0x78] sm:$0xff] %v695
    %v712 = vld [vmem:[#allocation9] sm:$0xff]
    %v713 = vld [vmem:[#allocation9 + $0x8] sm:$0xff]
    %v714 = vld [vmem:[#allocation9 + $0x10] sm:$0xff]
    %v715 = vld [vmem:[#allocation9 + $0x18] sm:$0xff]
    %v716 = vld [vmem:[#allocation9 + $0x20] sm:$0xff]
    %v717 = vld [vmem:[#allocation9 + $0x28] sm:$0xff]
    %v718 = vld [vmem:[#allocation9 + $0x30] sm:$0xff]
    %v719 = vld [vmem:[#allocation9 + $0x38] sm:$0xff]
    loop: start=0, step=1, limit=8
    $region61: #{encoder_forward.1} parent=1 // loop_pre_header
      _
    $region62: #{encoder_forward.1} parent=1 // loop_header
      %s721 = sphi 0, %s725
      %p722 = scmp.ge.s32.totalorder %s721, 8
      %v726 = vphi 0.0, %v878
      %v727 = vphi 0.0, %v879
      %v728 = vphi 0.0, %v866
      %v729 = vphi 0.0, %v867
    $region63: #{encoder_forward.1} parent=1 // loop_header_branch
      %724 = sbr.rel (%p722) target = $region67
    $region64: #{encoder_forward.1} parent=1 // loop_body
      %s730 = ssub.s32 7, %s721
      %s731 = smul.u32 %s721, 8
      %s732 = smul.u32 %s730, 8
      %735 = vrot.lane.b32.xlu0 %v726, 64
      %v736 = vpop.permute.xlu0 %735
      %737 = vrot.lane.b32.xlu0 %v727, 64
      %v738 = vpop.permute.xlu0 %737
      %v739 = vsel %vm477, %v736, 0
      %v741 = vsel %vm477, %v738, 0
      %743 = vmatprep.subr.mxu0 %v713
      %744 = vmatpush1.msra.mxu0 %v712
      %745 = vmatprep.subr.mxu0 %v715
      %746 = vmatpush1.msra.mxu0 %v714
      %747 = vmatprep.subr.mxu0 %v717
      %748 = vmatpush1.msra.mxu0 %v716
      %749 = vmatprep.subr.mxu0 %v719
      %750 = vmatpush1.msra.mxu0 %v718
      %751 = vmatprep.subr.mxu0 0.0
      %752 = vmatpush1.msra.mxu0 0.0
      %753 = vmatprep.subr.mxu0 0.0
      %754 = vmatpush1.msra.mxu0 0.0
      %755 = vmatprep.subr.mxu0 0.0
      %756 = vmatpush1.msra.mxu0 0.0
      %757 = vmatprep.subr.mxu0 0.0
      %758 = vmatpush1.msra.mxu0 0.0
      %759 = vmatprep.subr.mxu0 0.0
      %760 = vmatpush1.msra.mxu0 0.0
      %761 = vmatprep.subr.mxu0 0.0
      %762 = vmatpush1.msra.mxu0 0.0
      %763 = vmatprep.subr.mxu0 0.0
      %764 = vmatpush1.msra.mxu0 0.0
      %765 = vmatprep.subr.mxu0 0.0
      %766 = vmatpush1.msra.mxu0 0.0
      %767 = vmatprep.subr.mxu0 0.0
      %768 = vmatpush1.msra.mxu0 0.0
      %769 = vmatprep.subr.mxu0 0.0
      %770 = vmatpush1.msra.mxu0 0.0
      %771 = vmatprep.subr.mxu0 0.0
      %772 = vmatpush1.msra.mxu0 0.0
      %773 = vmatprep.subr.mxu0 0.0
      %774 = vmatpush1.msra.mxu0 0.0
      %775 = vmatprep.subr.mxu0 0.0
      %776 = vmatpush1.msra.mxu0 0.0
      %777 = vmatprep.subr.mxu0 0.0
      %778 = vmatpush1.msra.mxu0 0.0
      %779 = vmatprep.subr.mxu0 0.0
      %780 = vmatpush1.msra.mxu0 0.0
      %781 = vmatprep.subr.mxu0 0.0
      %782 = vmatpush1.msra.mxu0 0.0
      %783 = vmatprep.subr.mxu0 0.0
      %784 = vmatpush1.msra.mxu0 0.0
      %785 = vmatprep.subr.mxu0 0.0
      %786 = vmatpush1.msra.mxu0 0.0
      %787 = vmatprep.subr.mxu0 0.0
      %788 = vmatpush1.msra.mxu0 0.0
      %789 = vmatprep.subr.mxu0 0.0
      %790 = vmatpush1.msra.mxu0 0.0
      %791 = vmatprep.subr.mxu0 0.0
      %792 = vmatpush1.msra.mxu0 0.0
      %793 = vmatprep.subr.mxu0 0.0
      %794 = vmatpush1.msra.mxu0 0.0
      %795 = vmatprep.subr.mxu0 0.0
      %796 = vmatpush1.msra.mxu0 0.0
      %797 = vmatprep.subr.mxu0 0.0
      %798 = vmatpush1.msra.mxu0 0.0
      %799 = vmatprep.subr.mxu0 0.0
      %800 = vmatpush1.msra.mxu0 0.0
      %801 = vmatprep.subr.mxu0 0.0
      %802 = vmatpush1.msra.mxu0 0.0
      %803 = vmatprep.subr.mxu0 0.0
      %804 = vmatpush1.msra.mxu0 0.0
      %805 = vmatprep.subr.mxu0 0.0
      %806 = vmatpush1.msra.mxu0 0.0
      %807 = vmatprep.mubr.f32.mxu0 0.0
      %808 = vmatmul.mubr.f32.gmra.mrb[0].mxu0 %v739
      %v809 = vpop.f32.mrb[0].mxu0
      %v810 = vadd.f32 0.0, %v809
      %v811 = vpop.f32.mrb[0].mxu0
      %812 = vmatprep.mubr.f32.mxu0 0.0
      %813 = vmatmul.mubr.f32.gmra.mrb[0].mxu0 %v741
      %v814 = vpop.f32.mrb[0].mxu0
      %v815 = vpop.f32.mrb[0].mxu0
      %v816 = vadd.f32 0.0, %v815
      %817 = vdwg.mxu0
      %s818 = sshra.s32 %s731, 3
      %s819 = sand.u32 %s731, 7
      %s820 = smul.u32 %s818, 2
      %s821 = smul.addr %s820, 8
      %s822 = scalar_lea.vmem [#allocation4], %s821
      %v823 = vld [vmem:[%s822] sm:$0xff]
      %v824 = vadd.f32 %v823, %v810
      %s825 = sshra.s32 %s732, 3
      %s826 = sand.u32 %s732, 7
      %s827 = smul.u32 %s825, 2
      %s828 = smul.addr %s827, 8
      %s829 = scalar_lea.vmem [#allocation4], %s828
      %v830 = vld [vmem:[%s829 + $0x8] sm:$0xff]
      %v831 = vadd.f32 %v830, %v816
      %v832 = vxor.u32 %v824, 2147483648
      %v833 = vxor.u32 %v831, 2147483648
      %v834 = vmul.f32 %v832, 1.442695
      %v835 = vpow.pop %v834
      %v836 = vmul.f32 %v833, 1.442695
      %v837 = vpow.pop %v836
      %v838 = vadd.f32 %v835, 1.0
      %v839 = vadd.f32 %v837, 1.0
      %v840 = vrcp.pop %v838
      %v841 = vmul.f32 1.0, %v840
      %v842 = vrcp.pop %v839
      %v843 = vmul.f32 1.0, %v842
      %v844 = vtanh.pop %v824
      %v845 = vtanh.pop %v831
      %v846 = vmul.f32 %v841, %v728
      %v847 = vmul.f32 %v843, %v729
      %850 = vrot.lane.b32.xlu0 %v844, 32
      %v851 = vpop.permute.xlu0 %850
      %852 = vrot.lane.b32.xlu0 %v845, 32
      %v853 = vpop.permute.xlu0 %852
      %v856 = vmul.f32 %v841, %v851
      %v857 = vmul.f32 %v843, %v853
      %860 = vrot.lane.b32.xlu0 %v856, 32
      %v861 = vpop.permute.xlu0 %860
      %862 = vrot.lane.b32.xlu0 %v857, 32
      %v863 = vpop.permute.xlu0 %862
      %v866 = vadd.f32 %v846, %v861
      %v867 = vadd.f32 %v847, %v863
      %v868 = vtanh.pop %v866
      %v869 = vtanh.pop %v867
      %872 = vrot.lane.b32.xlu0 %v868, 32
      %v873 = vpop.permute.xlu0 %872
      %874 = vrot.lane.b32.xlu0 %v869, 32
      %v875 = vpop.permute.xlu0 %874
      %v878 = vmul.f32 %v841, %v873
      %v879 = vmul.f32 %v843, %v875
      %881 = vrot.lane.b32.xlu0 %v878, 64
      %v882 = vpop.permute.xlu0 %881
      %s884 = scalar_lea.vmem [#allocation2], %s731
      %885 = vst.msk [vmem:[%s884] sm:$0xff] %vm477, %v882
      %887 = vrot.lane.b32.xlu0 %v879, 64
      %v888 = vpop.permute.xlu0 %887
      %s890 = scalar_lea.vmem [#allocation3], %s732
      %891 = vst.msk [vmem:[%s890] sm:$0xff] %vm477, %v888
    $region65: #{encoder_forward.1} parent=1 // loop_footer
      %s725 = sadd.s32 1, %s721
    $region66: #{encoder_forward.1} parent=1 // loop_footer_branch
      %720 = sbr.rel target = $region62
    $region67: #{encoder_forward.1} parent=1 // loop_exit
      _
    %v892 = vld [vmem:[#allocation2] sm:$0xff]
    %v893 = vld [vmem:[#allocation2 + $0x8] sm:$0xff]
    %v894 = vld [vmem:[#allocation2 + $0x10] sm:$0xff]
    %v895 = vld [vmem:[#allocation2 + $0x18] sm:$0xff]
    %v896 = vld [vmem:[#allocation2 + $0x20] sm:$0xff]
    %v897 = vld [vmem:[#allocation2 + $0x28] sm:$0xff]
    %v898 = vld [vmem:[#allocation2 + $0x30] sm:$0xff]
    %v899 = vld [vmem:[#allocation2 + $0x38] sm:$0xff]
    %v900 = vld [vmem:[#allocation3] sm:$0xff]
    %v901 = vld [vmem:[#allocation3 + $0x8] sm:$0xff]
    %v902 = vld [vmem:[#allocation3 + $0x10] sm:$0xff]
    %v903 = vld [vmem:[#allocation3 + $0x18] sm:$0xff]
    %v904 = vld [vmem:[#allocation3 + $0x20] sm:$0xff]
    %v905 = vld [vmem:[#allocation3 + $0x28] sm:$0xff]
    %v906 = vld [vmem:[#allocation3 + $0x30] sm:$0xff]
    %v907 = vld [vmem:[#allocation3 + $0x38] sm:$0xff]
    %v908 = vadd.f32 %v892, %v900
    %v909 = vadd.f32 %v893, %v901
    %v910 = vadd.f32 %v894, %v902
    %v911 = vadd.f32 %v895, %v903
    %v912 = vadd.f32 %v896, %v904
    %v913 = vadd.f32 %v897, %v905
    %v914 = vadd.f32 %v898, %v906
    %v915 = vadd.f32 %v899, %v907
    %916 = vst.msk [vmem:[%s9] sm:$0xff] %vm477, %v908
    %917 = vst.msk [vmem:[%s9 + $0x8] sm:$0xff] %vm477, %v909
    %918 = vst.msk [vmem:[%s9 + $0x10] sm:$0xff] %vm477, %v910
    %919 = vst.msk [vmem:[%s9 + $0x18] sm:$0xff] %vm477, %v911
    %920 = vst.msk [vmem:[%s9 + $0x20] sm:$0xff] %vm477, %v912
    %921 = vst.msk [vmem:[%s9 + $0x28] sm:$0xff] %vm477, %v913
    %922 = vst.msk [vmem:[%s9 + $0x30] sm:$0xff] %vm477, %v914
    %923 = vst.msk [vmem:[%s9 + $0x38] sm:$0xff] %vm477, %v915
    %v924 = vadd.f32 %v726, %v727
    %v925 = vld [vmem:[#allocation10] sm:$0xff]
    %v926 = vld [vmem:[#allocation10 + $0x8] sm:$0xff]
    %v927 = vld [vmem:[#allocation10 + $0x10] sm:$0xff]
    %v928 = vld [vmem:[#allocation10 + $0x18] sm:$0xff]
    %930 = vrot.lane.b32.xlu0 %v924, 64
    %v931 = vpop.permute.xlu0 %930
    %v932 = vsel %vm477, %v931, 0
    %934 = vmatprep.subr.mxu0 0.0
    %935 = vmatpush1.msra.mxu0 %v925
    %936 = vmatprep.subr.mxu0 0.0
    %937 = vmatpush1.msra.mxu0 %v926
    %938 = vmatprep.subr.mxu0 0.0
    %939 = vmatpush1.msra.mxu0 %v927
    %940 = vmatprep.subr.mxu0 0.0
    %941 = vmatpush1.msra.mxu0 %v928
    %942 = vmatprep.subr.mxu0 0.0
    %943 = vmatpush1.msra.mxu0 0.0
    %944 = vmatprep.subr.mxu0 0.0
    %945 = vmatpush1.msra.mxu0 0.0
    %946 = vmatprep.subr.mxu0 0.0
    %947 = vmatpush1.msra.mxu0 0.0
    %948 = vmatprep.subr.mxu0 0.0
    %949 = vmatpush1.msra.mxu0 0.0
    %950 = vmatprep.subr.mxu0 0.0
    %951 = vmatpush1.msra.mxu0 0.0
    %952 = vmatprep.subr.mxu0 0.0
    %953 = vmatpush1.msra.mxu0 0.0
    %954 = vmatprep.subr.mxu0 0.0
    %955 = vmatpush1.msra.mxu0 0.0
    %956 = vmatprep.subr.mxu0 0.0
    %957 = vmatpush1.msra.mxu0 0.0
    %958 = vmatprep.subr.mxu0 0.0
    %959 = vmatpush1.msra.mxu0 0.0
    %960 = vmatprep.subr.mxu0 0.0
    %961 = vmatpush1.msra.mxu0 0.0
    %962 = vmatprep.subr.mxu0 0.0
    %963 = vmatpush1.msra.mxu0 0.0
    %964 = vmatprep.subr.mxu0 0.0
    %965 = vmatpush1.msra.mxu0 0.0
    %966 = vmatprep.subr.mxu0 0.0
    %967 = vmatpush1.msra.mxu0 0.0
    %968 = vmatprep.subr.mxu0 0.0
    %969 = vmatpush1.msra.mxu0 0.0
    %970 = vmatprep.subr.mxu0 0.0
    %971 = vmatpush1.msra.mxu0 0.0
    %972 = vmatprep.subr.mxu0 0.0
    %973 = vmatpush1.msra.mxu0 0.0
    %974 = vmatprep.subr.mxu0 0.0
    %975 = vmatpush1.msra.mxu0 0.0
    %976 = vmatprep.subr.mxu0 0.0
    %977 = vmatpush1.msra.mxu0 0.0
    %978 = vmatprep.subr.mxu0 0.0
    %979 = vmatpush1.msra.mxu0 0.0
    %980 = vmatprep.subr.mxu0 0.0
    %981 = vmatpush1.msra.mxu0 0.0
    %982 = vmatprep.subr.mxu0 0.0
    %983 = vmatpush1.msra.mxu0 0.0
    %984 = vmatprep.subr.mxu0 0.0
    %985 = vmatpush1.msra.mxu0 0.0
    %986 = vmatprep.subr.mxu0 0.0
    %987 = vmatpush1.msra.mxu0 0.0
    %988 = vmatprep.subr.mxu0 0.0
    %989 = vmatpush1.msra.mxu0 0.0
    %990 = vmatprep.subr.mxu0 0.0
    %991 = vmatpush1.msra.mxu0 0.0
    %992 = vmatprep.subr.mxu0 0.0
    %993 = vmatpush1.msra.mxu0 0.0
    %994 = vmatprep.subr.mxu0 0.0
    %995 = vmatpush1.msra.mxu0 0.0
    %996 = vmatprep.subr.mxu0 0.0
    %997 = vmatpush1.msra.mxu0 0.0
    %998 = vmatprep.mubr.f32.mxu0 0.0
    %999 = vmatmul.mubr.f32.gmra.mrb[0].mxu0 %v932
    %v1000 = vpop.f32.mrb[0].mxu0
    %v1001 = vadd.f32 0.0, %v1000
    %v1002 = vpop.f32.mrb[0].mxu0
    %1003 = vdwg.mxu0
    %v1004 = vtanh.pop %v1001
    %1005 = vst.msk [vmem:[%s10] sm:$0xff] %vm477, %v1004
    // Predicated region
    $region68: #{encoder_forward.1} parent=1 // pred_check
      _
    $region69: #{encoder_forward.1} parent=1 // pred_check_branch
      %1007 = sbr.rel (0) target = $region71
    $region70: #{encoder_forward.1} parent=1 // pred_region
      _
    $region71: #{encoder_forward.1} parent=1 // pred_fallthru
      _
    // Predicated region
    $region72: #{encoder_forward.1} parent=1 // pred_check
      _
    $region73: #{encoder_forward.1} parent=1 // pred_check_branch
      %1009 = sbr.rel (0) target = $region75
    $region74: #{encoder_forward.1} parent=1 // pred_region
      _
    $region75: #{encoder_forward.1} parent=1 // pred_fallthru
      _
    // Predicated region
    $region76: #{encoder_forward.1} parent=1 // pred_check
      _
    $region77: #{encoder_forward.1} parent=1 // pred_check_branch
      %1011 = sbr.rel (0) target = $region79
    $region78: #{encoder_forward.1} parent=1 // pred_region
      _
    $region79: #{encoder_forward.1} parent=1 // pred_fallthru
      _
    // Predicated region
    $region80: #{encoder_forward.1} parent=1 // pred_check
      _
    $region81: #{encoder_forward.1} parent=1 // pred_check_branch
      %1013 = sbr.rel (0) target = $region83
    $region82: #{encoder_forward.1} parent=1 // pred_region
      _
    $region83: #{encoder_forward.1} parent=1 // pred_fallthru
      _
    %1014 = vsyncpa [#allocation6], 1
    %1015 = vsyncpa [#allocation8], 1
    %1016 = vsyncpa [#allocation11], 1

</llo_original>
